<compile_context>
chip_gen: v7x
topology: tpu7x:2x2x1
jax: 0.10.0
libtpu: 0.0.40
codegen_flags: <defaults>
</compile_context>

<pallas_src>
import math

import jax
import jax.numpy as jnp
from jax.experimental import pallas as pl
from jax.experimental.pallas import tpu as pltpu


# --------------------------------------------------------------------------- helpers
def _round_up(x, m):
    return ((x + m - 1) // m) * m


def _block_diag(block, n):
    """(a, b) block -> (n*a, n*b) block-diagonal matrix (off-diagonal exactly zero)."""
    a, b = block.shape
    eye = jnp.eye(n, dtype=block.dtype)
    return (eye[:, None, :, None] * block[None, :, None, :]).reshape(n * a, n * b)


def _vmem_ceiling():
    """Request at most ~75% of physical VMEM (≈48 MiB v7x, ≈96 MiB v5e/v6e)."""
    try:
        cap = int(pltpu.get_tpu_info().vmem_capacity_bytes)
    except Exception:
        cap = 64 << 20
    return int(min(int(cap * 0.75), 100 << 20))


# --------------------------------------------------------------------------- sizing / init
def compute_dims(n_instance, n_dim, hidden_dim):
    """Replicates VAE.__init__ size bookkeeping (1 layer before / 1 after flatten)."""
    h1 = hidden_dim                                  # Linear(n_dim -> h1)
    flat = n_instance * h1                           # after Flatten
    h2 = int(flat / (1.0 + 3.0 * 1.0))               # Linear(flat -> h2)
    embed = int(h2 / (1.0 + 3.0 * 0.75))             # fc1/fc2: Linear(h2 -> embed)
    return {"h1": h1, "flat": flat, "h2": h2, "embed": embed}


def init_params(key, n_instance, n_dim, hidden_dim):
    dims = compute_dims(n_instance, n_dim, hidden_dim)

    def linear(k, fan_in, fan_out):
        kw, kb = jax.random.split(k)
        bound = 1.0 / math.sqrt(fan_in)
        w = jax.random.uniform(kw, (fan_out, fan_in), jnp.float32, -bound, bound)
        b = jax.random.uniform(kb, (fan_out,), jnp.float32, -bound, bound)
        return w, b

    ks = jax.random.split(key, 7)
    p = {
        "enc1": linear(ks[0], n_dim, dims["h1"]),            # per-instance (shared)
        "enc2": linear(ks[1], dims["flat"], dims["h2"]),
        "fc1":  linear(ks[2], dims["h2"], dims["embed"]),
        "fc2":  linear(ks[3], dims["h2"], dims["embed"]),
        "dec1": linear(ks[4], dims["embed"], dims["h2"]),
        "dec2": linear(ks[5], dims["h2"], dims["flat"]),
        "dec3": linear(ks[6], dims["h1"], n_dim),             # per-instance (shared)
    }
    return p, dims


# --------------------------------------------------------------------------- fused (block-diag) path
def _pack_fused_weights(params, N, D, H1, H2, E, Ep, cdt):
    """Pack all weights into one slab (cdt) and all biases into one slab (f32).

    Weight blocks are stacked vertically at 8-aligned row offsets; each block's
    columns start at lane 0 (prefix loads, no rotates).
    """
    f32 = jnp.float32
    ND, NH1, E2 = N * D, N * H1, 2 * Ep

    w_enc1, b_enc1 = params["enc1"]      # (H1, D), (H1,)
    w_enc2, b_enc2 = params["enc2"]      # (H2, N*H1), (H2,)
    w_fc1, b_fc1 = params["fc1"]         # (E, H2), (E,)
    w_fc2, b_fc2 = params["fc2"]
    w_dec1, b_dec1 = params["dec1"]      # (H2, E), (H2,)
    w_dec2, b_dec2 = params["dec2"]      # (N*H1, H2), (N*H1,)
    w_dec3, b_dec3 = params["dec3"]      # (D, H1), (D,)

    # Fused [mu | logvar] head, each half padded to Ep (128-lane aligned).
    wml = (jnp.zeros((H2, E2), f32)
           .at[:, :E].set(w_fc1.T)
           .at[:, Ep:Ep + E].set(w_fc2.T))
    wd1 = jnp.zeros((Ep, H2), f32).at[:E, :].set(w_dec1.T)

    blocks = [
        _block_diag(w_enc1.T, N),        # 0: (ND , NH1)  encoder per-instance (block-diag)
        w_enc2.T,                        # 1: (NH1, H2 )  post-flatten encoder
        wml,                             # 2: (H2 , 2Ep)  fused mu/logvar head
        wd1,                             # 3: (Ep , H2 )  decoder E -> H2
        w_dec2.T,                        # 4: (H2 , NH1)  decoder H2 -> N*H1
        _block_diag(w_dec3.T, N),        # 5: (NH1, ND )  decoder per-instance (block-diag)
    ]
    biases = [
        jnp.tile(b_enc1, N),                                           # (NH1,)
        b_enc2,                                                        # (H2,)
        jnp.zeros((E2,), f32).at[:E].set(b_fc1).at[Ep:Ep + E].set(b_fc2),
        b_dec1,                                                        # (H2,)
        b_dec2,                                                        # (NH1,)
        jnp.tile(b_dec3, N),                                           # (ND,)
    ]

    lanes = _round_up(max(blk.shape[1] for blk in blocks), 128)
    offs, rows = [], 0
    for blk in blocks:
        offs.append(rows)
        rows += _round_up(blk.shape[0], 8)
    w_slab = jnp.zeros((rows, lanes), cdt)
    for off, blk in zip(offs, blocks):
        w_slab = w_slab.at[off:off + blk.shape[0], :blk.shape[1]].set(blk.astype(cdt))

    b_lanes = _round_up(max(bb.shape[0] for bb in biases), 128)
    b_slab = jnp.zeros((8, b_lanes), f32)
    for i, bb in enumerate(biases):
        b_slab = b_slab.at[i, :bb.shape[0]].set(bb.astype(f32))

    return w_slab, b_slab, tuple(offs)


def _make_fused_kernel(N, D, H1, H2, Ep, offs):
    """Six full-width GEMMs; recon written directly as a lane-dense (TB, N*D) slab."""
    ND, NH1, E2 = N * D, N * H1, 2 * Ep
    shapes = [(ND, NH1), (NH1, H2), (H2, E2), (Ep, H2), (H2, NH1), (NH1, ND)]

    def kernel(x_ref, eps_ref, w_ref, b_ref, recon_ref, ml_ref):
        f32 = jnp.float32
        cdt = w_ref.dtype

        def w(i):
            off = offs[i]
            r, c = shapes[i]
            return w_ref[off:off + r, :c]                     # resident VMEM sub-block

        ball = b_ref[...]                                     # (8, Lb) f32, tiny

        def b(i):
            return ball[i:i + 1, :shapes[i][1]]

        x = x_ref[...].astype(cdt)                            # single hoisted cast
        # ---- encoder -------------------------------------------------------
        h1 = jnp.maximum(jnp.dot(x, w(0), preferred_element_type=f32) + b(0), 0.0)
        h2 = jnp.maximum(jnp.dot(h1.astype(cdt), w(1),
                                 preferred_element_type=f32) + b(1), 0.0)
        # ---- fused mu / logvar head (lane-aligned halves) --------------------
        ml = jnp.dot(h2.astype(cdt), w(2), preferred_element_type=f32) + b(2)
        mu = ml[:, :Ep]
        logvar = ml[:, Ep:]
        # ---- reparameterize (f32 on VPU/EUP) --------------------------------
        z = mu + eps_ref[...] * jnp.exp(0.5 * logvar)
        # ---- decoder ---------------------------------------------------------
        d1 = jnp.maximum(jnp.dot(z.astype(cdt), w(3),
                                 preferred_element_type=f32) + b(3), 0.0)
        d2 = jnp.maximum(jnp.dot(d1.astype(cdt), w(4),
                                 preferred_element_type=f32) + b(4), 0.0)
        recon_ref[...] = jnp.dot(d2.astype(cdt), w(5),
                                 preferred_element_type=f32) + b(5)
        ml_ref[...] = ml

    return kernel


# --------------------------------------------------------------------------- loop fallback path
def _prepare_loop_weights(params, N, D, H1, H2, E, Ep, cdt):
    f32 = jnp.float32
    E2 = 2 * Ep
    w_enc1, b_enc1 = params["enc1"]
    w_enc2, b_enc2 = params["enc2"]
    w_fc1, b_fc1 = params["fc1"]
    w_fc2, b_fc2 = params["fc2"]
    w_dec1, b_dec1 = params["dec1"]
    w_dec2, b_dec2 = params["dec2"]
    w_dec3, b_dec3 = params["dec3"]

    we1 = w_enc1.T.astype(cdt)                                       # (D, H1) shared
    be1 = b_enc1.reshape(1, -1).astype(f32)
    we2 = w_enc2.T.reshape(N, H1, H2).astype(cdt)                    # (N, H1, H2)
    be2 = b_enc2.reshape(1, -1).astype(f32)
    wml = (jnp.zeros((H2, E2), f32).at[:, :E].set(w_fc1.T)
           .at[:, Ep:Ep + E].set(w_fc2.T)).astype(cdt)               # (H2, 2Ep)
    bml = (jnp.zeros((1, E2), f32).at[0, :E].set(b_fc1)
           .at[0, Ep:Ep + E].set(b_fc2))
    wd1 = jnp.zeros((Ep, H2), f32).at[:E, :].set(w_dec1.T).astype(cdt)
    bd1 = b_dec1.reshape(1, -1).astype(f32)
    wd2 = w_dec2.reshape(N, H1, H2).transpose(0, 2, 1).astype(cdt)   # (N, H2, H1)
    bd2 = b_dec2.reshape(N, 1, H1).astype(f32)
    wd3 = w_dec3.T.astype(cdt)                                       # (H1, D) shared
    bd3 = b_dec3.reshape(1, -1).astype(f32)
    return (we1, be1, we2, be2, wml, bml, wd1, bd1, wd2, bd2, wd3, bd3)


def _vae_loop_kernel(x_ref, eps_ref,
                     we1_ref, be1_ref, we2_ref, be2_ref,
                     wml_ref, bml_ref, wd1_ref, bd1_ref,
                     wd2_ref, bd2_ref, wd3_ref, bd3_ref,
                     recon_ref, ml_ref):
    """Fallback for huge N*H1/N*D where block-diag weights would be too big."""
    f32 = jnp.float32
    cdt = we1_ref.dtype
    N, H1, H2 = we2_ref.shape
    D = we1_ref.shape[0]
    Ep = eps_ref.shape[-1]
    TB = x_ref.shape[0]

    x = x_ref[...].astype(cdt)                                   # hoisted single cast
    we1 = we1_ref[...]
    be1 = jnp.broadcast_to(be1_ref[...], (TB, H1))               # hoisted broadcast

    # encoder: per-instance Linear+ReLU fused with the flatten GEMM via accumulation
    h2_pre = jnp.zeros((TB, H2), f32)
    for n in range(N):                                           # static unroll
        h1n = jnp.dot(x[:, n * D:(n + 1) * D], we1,
                      preferred_element_type=f32) + be1
        h1n = jnp.maximum(h1n, 0.0)
        h2_pre = h2_pre + jnp.dot(h1n.astype(cdt), we2_ref[n],
                                  preferred_element_type=f32)
    h2 = jnp.maximum(h2_pre + be2_ref[...], 0.0)

    ml = jnp.dot(h2.astype(cdt), wml_ref[...],
                 preferred_element_type=f32) + bml_ref[...]      # (TB, 2Ep)
    mu = ml[:, :Ep]
    logvar = ml[:, Ep:]
    z = mu + eps_ref[...] * jnp.exp(0.5 * logvar)

    d1 = jnp.maximum(jnp.dot(z.astype(cdt), wd1_ref[...],
                             preferred_element_type=f32) + bd1_ref[...], 0.0)
    d1c = d1.astype(cdt)                                         # hoisted cast
    wd3 = wd3_ref[...]
    bd3 = jnp.broadcast_to(bd3_ref[...], (TB, D))                # hoisted broadcast
    for n in range(N):
        d2n = jnp.maximum(jnp.dot(d1c, wd2_ref[n],
                                  preferred_element_type=f32) + bd2_ref[n], 0.0)
        recon_ref[:, n * D:(n + 1) * D] = jnp.dot(d2n.astype(cdt), wd3,
                                                  preferred_element_type=f32) + bd3
    ml_ref[...] = ml


# --------------------------------------------------------------------------- wrapper
def vae_forward_pallas(x, eps, params, dims, *, batch_tile=None,
                       matmul_dtype=jnp.float32, use_blockdiag=None,
                       blockdiag_max_bytes=2 << 20):
    B, N, D = x.shape
    H1, H2, E = dims["h1"], dims["h2"], dims["embed"]
    ND, NH1 = N * D, N * H1
    Ep = _round_up(max(E, 1), 128)            # lane-aligned mu/logvar halves
    cdt = matmul_dtype
    itemsize = jnp.dtype(cdt).itemsize

    if use_blockdiag is None:                 # gate: block-diag weight stays small
        use_blockdiag = ND * NH1 * itemsize <= blockdiag_max_bytes

    # Batch tile: big tiles amortize the ~0.35us/step overhead and fill MXU
    # sublanes, but keep >=2 (ideally ~4) grid steps so both v7x TCs get work.
    if batch_tile is not None:
        tb = max(8, _round_up(int(batch_tile), 8))
    else:
        tb = min(512, max(8, _round_up(pl.cdiv(B, 4), 8)))
    Bp = _round_up(B, tb)
    grid = (Bp // tb,)

    x2 = x.reshape(B, ND).astype(jnp.float32)
    if Bp != B:
        x2 = jnp.pad(x2, ((0, Bp - B), (0, 0)))
    eps_p = jnp.zeros((Bp, Ep), jnp.float32).at[:B, :E].set(eps.astype(jnp.float32))

    def batch_spec(feat):
        return pl.BlockSpec((tb, feat), lambda i: (i, 0))

    def resident_spec(arr):                   # full array, constant index -> stays in VMEM
        nd = arr.ndim
        return pl.BlockSpec(arr.shape, lambda i, _nd=nd: (0,) * _nd)

    out_shape = (jax.ShapeDtypeStruct((Bp, ND), jnp.float32),
                 jax.ShapeDtypeStruct((Bp, 2 * Ep), jnp.float32))
    out_specs = (batch_spec(ND), batch_spec(2 * Ep))

    if use_blockdiag:
        w_slab, b_slab, offs = _pack_fused_weights(params, N, D, H1, H2, E, Ep, cdt)
        kernel = _make_fused_kernel(N, D, H1, H2, Ep, offs)
        operands = (x2, eps_p, w_slab, b_slab)
        in_specs = [batch_spec(ND), batch_spec(Ep),
                    resident_spec(w_slab), resident_spec(b_slab)]
        weight_bytes = int(w_slab.size) * itemsize + int(b_slab.size) * 4
        gemm_flops = 2 * Bp * (ND * NH1 + NH1 * H2 + H2 * 2 * Ep
                               + Ep * H2 + H2 * NH1 + NH1 * ND)
    else:
        weights = _prepare_loop_weights(params, N, D, H1, H2, E, Ep, cdt)
        kernel = _vae_loop_kernel
        operands = (x2, eps_p) + weights
        in_specs = ([batch_spec(ND), batch_spec(Ep)]
                    + [resident_spec(w) for w in weights])
        weight_bytes = sum(int(w.size) * w.dtype.itemsize for w in weights)
        gemm_flops = 2 * Bp * (N * D * H1 + NH1 * H2 + H2 * 2 * Ep
                               + Ep * H2 + H2 * NH1 + N * H1 * D)

    # Advisory cost estimate.
    io_bytes = int(x2.size * 4 + eps_p.size * 4 + Bp * ND * 4
                   + Bp * 2 * Ep * 4 + weight_bytes)
    cost = pl.CostEstimate(flops=int(gemm_flops), transcendentals=int(Bp * Ep),
                           bytes_accessed=io_bytes)

    # VMEM budget: resident weights (x2 for safety) + double-buffered activation
    # tiles + intermediates + headroom, capped below physical VMEM.
    act_cols = ND + Ep + ND + 2 * Ep
    inter_cols = NH1 + H2 + 2 * Ep + Ep + H2 + NH1
    vmem_needed = 2 * weight_bytes + 2 * tb * act_cols * 4 + tb * inter_cols * 4 + (8 << 20)
    vmem_limit = int(min(max(vmem_needed, 16 << 20), _vmem_ceiling()))

    recon2, ml = pl.pallas_call(
        kernel,
        grid=grid,
        in_specs=in_specs,
        out_specs=out_specs,
        out_shape=out_shape,
        compiler_params=pltpu.CompilerParams(
            dimension_semantics=("parallel",),       # batch axis split across TCs (v7x)
            vmem_limit_bytes=vmem_limit),
        cost_estimate=cost,
    )(*operands)

    recon = recon2[:B].reshape(B, N, D)
    mu = ml[:B, :E]
    logvar = ml[:B, Ep:Ep + E]
    return recon, mu, logvar


# --------------------------------------------------------------------------- reference
def vae_forward_ref(x, eps, params):
    """Pure-JAX reference mirroring the PyTorch forward (for validation)."""
    B, N, D = x.shape
    w, b = params["enc1"]
    h1 = jax.nn.relu(jnp.einsum("bnd,kd->bnk", x, w) + b)
    h1f = h1.reshape(B, -1)
    w, b = params["enc2"]
    h2 = jax.nn.relu(h1f @ w.T + b)
    mu = h2 @ params["fc1"][0].T + params["fc1"][1]
    logvar = h2 @ params["fc2"][0].T + params["fc2"][1]
    z = mu + eps * jnp.exp(0.5 * logvar)
    d1 = jax.nn.relu(z @ params["dec1"][0].T + params["dec1"][1])
    d2 = jax.nn.relu(d1 @ params["dec2"][0].T + params["dec2"][1])
    d2u = d2.reshape(B, N, -1)
    w, b = params["dec3"]
    recon = jnp.einsum("bnk,dk->bnd", d2u, w) + b
    return recon, mu, logvar


# --------------------------------------------------------------------------- demo
if __name__ == "__main__":
    # input_dim = (n_instance, n_dim) = (8, 32), hidden_dim = 16, batch = 16
    B, N, D, HID = 16, 8, 32, 16
    key = jax.random.PRNGKey(0)
    kx, keps, kp = jax.random.split(key, 3)

    params, dims = init_params(kp, N, D, HID)          # embed_dim == 9 here
    x = jax.random.normal(kx, (B, N, D), jnp.float32)
    # TODO(synk): torch.randn_like noise is sampled host-side with jax.random
    # (and passed into the kernel) to keep the run deterministic/checkable.
    eps = jax.random.normal(keps, (B, dims["embed"]), jnp.float32)

    r_ref, mu_ref, lv_ref = vae_forward_ref(x, eps, params)

    # Fused block-diag GEMM path (default); default tiling -> 2 grid steps here.
    recon, mu, logvar = jax.block_until_ready(vae_forward_pallas(x, eps, params, dims))
    assert recon.shape == (B, N, D) and mu.shape == (B, dims["embed"])
    assert jnp.allclose(recon, r_ref, atol=1e-3, rtol=1e-3)
    assert jnp.allclose(mu, mu_ref, atol=1e-3, rtol=1e-3)
    assert jnp.allclose(logvar, lv_ref, atol=1e-3, rtol=1e-3)

    # Per-instance loop fallback path (used automatically when block-diag weights
    # would exceed the byte gate); exercised here for coverage.
    recon_l, mu_l, lv_l = jax.block_until_ready(
        vae_forward_pallas(x, eps, params, dims, use_blockdiag=False))
    assert jnp.allclose(recon_l, r_ref, atol=1e-3, rtol=1e-3)
    assert jnp.allclose(mu_l, mu_ref, atol=1e-3, rtol=1e-3)
    assert jnp.allclose(lv_l, lv_ref, atol=1e-3, rtol=1e-3)

    # bf16 MXU-input path (f32 accumulation + f32 elementwise) — good on v5e/v6e/v7x.
    recon_bf, mu_bf, lv_bf = jax.block_until_ready(
        vae_forward_pallas(x, eps, params, dims, matmul_dtype=jnp.bfloat16))
    assert jnp.allclose(recon_bf, r_ref, atol=1e-1, rtol=1e-1)
    assert jnp.allclose(mu_bf, mu_ref, atol=1e-1, rtol=1e-1)

    print("KERNEL_OK")
</pallas_src>

<mosaic_0001>
module attributes {stable_mosaic.version = 11 : i64} {
  func.func @kernel(%arg0: i32, %arg1: memref<8x256xf32, #tpu.memory_space<vmem>>, %arg2: memref<8x128xf32, #tpu.memory_space<vmem>>, %arg3: memref<704x256xf32, #tpu.memory_space<vmem>>, %arg4: memref<8x256xf32, #tpu.memory_space<vmem>>, %arg5: memref<8x256xf32, #tpu.memory_space<vmem>>, %arg6: memref<8x256xf32, #tpu.memory_space<vmem>>) attributes {dimension_semantics = [#tpu.dimension_semantics<parallel>], iteration_bounds = array<i64: 2>, scalar_prefetch = 0 : i64, scratch_operands = 0 : i64, tpu.core_type = #tpu.core_type<tc>, window_params = [{transform_indices = @transform_0, window_bounds = array<i64: 8, 256>}, {transform_indices = @transform_1, window_bounds = array<i64: 8, 128>}, {pipeline_mode = #tpu.pipeline_mode<synchronous>, transform_indices = @transform_2, window_bounds = array<i64: 704, 256>}, {pipeline_mode = #tpu.pipeline_mode<synchronous>, transform_indices = @transform_3, window_bounds = array<i64: 8, 256>}, {transform_indices = @transform_4, window_bounds = array<i64: 8, 256>}, {transform_indices = @transform_5, window_bounds = array<i64: 8, 256>}]} {
    %c0 = arith.constant 0 : index
    %c0_0 = arith.constant 0 : index
    %0 = vector.load %arg4[%c0, %c0_0] : memref<8x256xf32, #tpu.memory_space<vmem>>, vector<8x256xf32>
    %c0_1 = arith.constant 0 : index
    %c0_2 = arith.constant 0 : index
    %1 = vector.load %arg1[%c0_1, %c0_2] : memref<8x256xf32, #tpu.memory_space<vmem>>, vector<8x256xf32>
    %c0_3 = arith.constant 0 : index
    %c0_4 = arith.constant 0 : index
    %2 = vector.load %arg3[%c0_3, %c0_4] : memref<704x256xf32, #tpu.memory_space<vmem>>, vector<256x128xf32>
    %cst = arith.constant dense<0.000000e+00> : vector<8x128xf32>
    %3 = tpu.matmul %1, %2, %cst {dimension_numbers = #tpu.dot_dimension_numbers<[1], [0], [0], [1], [0, 0, 1, 1], [], []>} : vector<8x256xf32>, vector<256x128xf32>, vector<8x128xf32> -> vector<8x128xf32>
    %4 = vector.extract_strided_slice %0 {offsets = [0, 0], sizes = [1, 128], strides = [1, 1]} : vector<8x256xf32> to vector<1x128xf32>
    %5 = vector.broadcast %4 : vector<1x128xf32> to vector<8x128xf32>
    %6 = arith.addf %3, %5 : vector<8x128xf32>
    %cst_5 = arith.constant 0.000000e+00 : f32
    %7 = vector.broadcast %cst_5 : f32 to vector<8x128xf32>
    %8 = arith.maximumf %6, %7 : vector<8x128xf32>
    %c256 = arith.constant 256 : index
    %c0_6 = arith.constant 0 : index
    %9 = vector.load %arg3[%c256, %c0_6] : memref<704x256xf32, #tpu.memory_space<vmem>>, vector<128x32xf32>
    %cst_7 = arith.constant dense<0.000000e+00> : vector<8x32xf32>
    %10 = tpu.matmul %8, %9, %cst_7 {dimension_numbers = #tpu.dot_dimension_numbers<[1], [0], [0], [1], [0, 0, 1, 1], [], []>} : vector<8x128xf32>, vector<128x32xf32>, vector<8x32xf32> -> vector<8x32xf32>
    %11 = vector.extract_strided_slice %0 {offsets = [1, 0], sizes = [1, 32], strides = [1, 1]} : vector<8x256xf32> to vector<1x32xf32>
    %12 = vector.broadcast %11 : vector<1x32xf32> to vector<8x32xf32>
    %13 = arith.addf %10, %12 : vector<8x32xf32>
    %cst_8 = arith.constant 0.000000e+00 : f32
    %14 = vector.broadcast %cst_8 : f32 to vector<8x32xf32>
    %15 = arith.maximumf %13, %14 : vector<8x32xf32>
    %c384 = arith.constant 384 : index
    %c0_9 = arith.constant 0 : index
    %16 = vector.load %arg3[%c384, %c0_9] : memref<704x256xf32, #tpu.memory_space<vmem>>, vector<32x256xf32>
    %cst_10 = arith.constant dense<0.000000e+00> : vector<8x256xf32>
    %17 = tpu.matmul %15, %16, %cst_10 {dimension_numbers = #tpu.dot_dimension_numbers<[1], [0], [0], [1], [0, 0, 1, 1], [], []>} : vector<8x32xf32>, vector<32x256xf32>, vector<8x256xf32> -> vector<8x256xf32>
    %18 = vector.extract_strided_slice %0 {offsets = [2, 0], sizes = [1, 256], strides = [1, 1]} : vector<8x256xf32> to vector<1x256xf32>
    %19 = vector.broadcast %18 : vector<1x256xf32> to vector<8x256xf32>
    %20 = arith.addf %17, %19 : vector<8x256xf32>
    %21 = vector.extract_strided_slice %20 {offsets = [0, 0], sizes = [8, 128], strides = [1, 1]} : vector<8x256xf32> to vector<8x128xf32>
    %22 = vector.extract_strided_slice %20 {offsets = [0, 128], sizes = [8, 128], strides = [1, 1]} : vector<8x256xf32> to vector<8x128xf32>
    %c0_11 = arith.constant 0 : index
    %c0_12 = arith.constant 0 : index
    %23 = vector.load %arg2[%c0_11, %c0_12] : memref<8x128xf32, #tpu.memory_space<vmem>>, vector<8x128xf32>
    %cst_13 = arith.constant 5.000000e-01 : f32
    %24 = vector.broadcast %cst_13 : f32 to vector<8x128xf32>
    %25 = arith.mulf %24, %22 : vector<8x128xf32>
    %26 = math.exp %25 : vector<8x128xf32>
    %27 = arith.mulf %23, %26 : vector<8x128xf32>
    %28 = arith.addf %21, %27 : vector<8x128xf32>
    %c416 = arith.constant 416 : index
    %c0_14 = arith.constant 0 : index
    %29 = vector.load %arg3[%c416, %c0_14] : memref<704x256xf32, #tpu.memory_space<vmem>>, vector<128x32xf32>
    %cst_15 = arith.constant dense<0.000000e+00> : vector<8x32xf32>
    %30 = tpu.matmul %28, %29, %cst_15 {dimension_numbers = #tpu.dot_dimension_numbers<[1], [0], [0], [1], [0, 0, 1, 1], [], []>} : vector<8x128xf32>, vector<128x32xf32>, vector<8x32xf32> -> vector<8x32xf32>
    %31 = vector.extract_strided_slice %0 {offsets = [3, 0], sizes = [1, 32], strides = [1, 1]} : vector<8x256xf32> to vector<1x32xf32>
    %32 = vector.broadcast %31 : vector<1x32xf32> to vector<8x32xf32>
    %33 = arith.addf %30, %32 : vector<8x32xf32>
    %cst_16 = arith.constant 0.000000e+00 : f32
    %34 = vector.broadcast %cst_16 : f32 to vector<8x32xf32>
    %35 = arith.maximumf %33, %34 : vector<8x32xf32>
    %c544 = arith.constant 544 : index
    %c0_17 = arith.constant 0 : index
    %36 = vector.load %arg3[%c544, %c0_17] : memref<704x256xf32, #tpu.memory_space<vmem>>, vector<32x128xf32>
    %cst_18 = arith.constant dense<0.000000e+00> : vector<8x128xf32>
    %37 = tpu.matmul %35, %36, %cst_18 {dimension_numbers = #tpu.dot_dimension_numbers<[1], [0], [0], [1], [0, 0, 1, 1], [], []>} : vector<8x32xf32>, vector<32x128xf32>, vector<8x128xf32> -> vector<8x128xf32>
    %38 = vector.extract_strided_slice %0 {offsets = [4, 0], sizes = [1, 128], strides = [1, 1]} : vector<8x256xf32> to vector<1x128xf32>
    %39 = vector.broadcast %38 : vector<1x128xf32> to vector<8x128xf32>
    %40 = arith.addf %37, %39 : vector<8x128xf32>
    %cst_19 = arith.constant 0.000000e+00 : f32
    %41 = vector.broadcast %cst_19 : f32 to vector<8x128xf32>
    %42 = arith.maximumf %40, %41 : vector<8x128xf32>
    %c576 = arith.constant 576 : index
    %c0_20 = arith.constant 0 : index
    %43 = vector.load %arg3[%c576, %c0_20] : memref<704x256xf32, #tpu.memory_space<vmem>>, vector<128x256xf32>
    %cst_21 = arith.constant dense<0.000000e+00> : vector<8x256xf32>
    %44 = tpu.matmul %42, %43, %cst_21 {dimension_numbers = #tpu.dot_dimension_numbers<[1], [0], [0], [1], [0, 0, 1, 1], [], []>} : vector<8x128xf32>, vector<128x256xf32>, vector<8x256xf32> -> vector<8x256xf32>
    %45 = vector.extract_strided_slice %0 {offsets = [5, 0], sizes = [1, 256], strides = [1, 1]} : vector<8x256xf32> to vector<1x256xf32>
    %46 = vector.broadcast %45 : vector<1x256xf32> to vector<8x256xf32>
    %47 = arith.addf %44, %46 : vector<8x256xf32>
    %c0_22 = arith.constant 0 : index
    %c0_23 = arith.constant 0 : index
    %48 = vector.load %arg5[%c0_22, %c0_23] : memref<8x256xf32, #tpu.memory_space<vmem>>, vector<8x256xf32>
    tpu.vector_store %arg5[%c0_22, %c0_23], %47 {strides = array<i32>} : memref<8x256xf32, #tpu.memory_space<vmem>>, vector<8x256xf32>,
    %c0_24 = arith.constant 0 : index
    %c0_25 = arith.constant 0 : index
    %49 = vector.load %arg6[%c0_24, %c0_25] : memref<8x256xf32, #tpu.memory_space<vmem>>, vector<8x256xf32>
    tpu.vector_store %arg6[%c0_24, %c0_25], %20 {strides = array<i32>} : memref<8x256xf32, #tpu.memory_space<vmem>>, vector<8x256xf32>,
    return
  }
  func.func @transform_0(%arg0: i32) -> (i32, i32) {
    %c0_i32 = arith.constant 0 : i32
    %c0_i32_0 = arith.constant 0 : i32
    return %arg0, %c0_i32 : i32, i32
  }
  func.func @transform_1(%arg0: i32) -> (i32, i32) {
    %c0_i32 = arith.constant 0 : i32
    %c0_i32_0 = arith.constant 0 : i32
    return %arg0, %c0_i32 : i32, i32
  }
  func.func @transform_2(%arg0: i32) -> (i32, i32) {
    %c0_i32 = arith.constant 0 : i32
    %c0_i32_0 = arith.constant 0 : i32
    %c0_i32_1 = arith.constant 0 : i32
    return %c0_i32, %c0_i32_0 : i32, i32
  }
  func.func @transform_3(%arg0: i32) -> (i32, i32) {
    %c0_i32 = arith.constant 0 : i32
    %c0_i32_0 = arith.constant 0 : i32
    %c0_i32_1 = arith.constant 0 : i32
    return %c0_i32, %c0_i32_0 : i32, i32
  }
  func.func @transform_4(%arg0: i32) -> (i32, i32) {
    %c0_i32 = arith.constant 0 : i32
    %c0_i32_0 = arith.constant 0 : i32
    return %arg0, %c0_i32 : i32, i32
  }
  func.func @transform_5(%arg0: i32) -> (i32, i32) {
    %c0_i32 = arith.constant 0 : i32
    %c0_i32_0 = arith.constant 0 : i32
    return %arg0, %c0_i32 : i32, i32
  }
}

</mosaic_0001>

<llo_original>
// kernel: tpu_custom_call.1
$region0: #{tpu_custom_call.1}
  #allocation0 [shape = 'u32[]', space=smem, size = 0x4, offset = 0x4, fixed_abs, tag = 'smem constant byte address 0x4 - core index']
  #allocation1 [shape = 'u32[144,128]{1,0:T(1,128)}', space=vmem, size = 0x12000, scoped, tag = 'internal scratch']
  %s0 = inlined_call_operand.hbm [shape: f32[16,256], index: 0, kind: input, shape index: {}]
  %s1 = inlined_call_operand.hbm [shape: f32[16,128], index: 1, kind: input, shape index: {}]
  %s2 = inlined_call_operand.hbm [shape: f32[704,256], index: 2, kind: input, shape index: {}]
  %s3 = inlined_call_operand.hbm [shape: f32[8,256], index: 3, kind: input, shape index: {}]
  %s4 = inlined_call_operand.hbm [shape: f32[16,256], index: 4, kind: output, shape index: {0}]
  %s5 = inlined_call_operand.hbm [shape: f32[16,256], index: 5, kind: output, shape index: {1}]
  %6 = xla_tuple %s4, %s5
  %s7 = sld [smem:[#allocation0]]
  $region73: #{tpu_custom_call.1} parent=0
    _
  %s9 = ssub.s32 1, %s7
  %s10 = scalar_select 0, %s9, %s7
  $region1: #{tpu_custom_call.1} parent=0
    #allocation2 [shape = 'u8[16384]{0}', space=vmem, size = 0x4000, scoped, tag = 'input window, operand 0']
    #allocation3 [shape = 's32[2]{0}', space=sflag, size = 0x8, scoped, tag = 'scoped memory for tpu_custom_call.1']
    #allocation4 [shape = 's32[2]{0}', space=sflag, size = 0x8, scoped, tag = 'scoped memory for tpu_custom_call.1']
    #allocation5 [shape = 'u8[8192]{0}', space=vmem, size = 0x2000, scoped, tag = 'input window, operand 1']
    #allocation6 [shape = 's32[2]{0}', space=sflag, size = 0x8, scoped, tag = 'scoped memory for tpu_custom_call.1']
    #allocation7 [shape = 'u8[720896]{0}', space=vmem, size = 0xb0000, scoped, tag = 'input window, operand 2, single buffered']
    #allocation8 [shape = 'u8[8192]{0}', space=vmem, size = 0x2000, scoped, tag = 'input window, operand 3, single buffered']
    #allocation9 [shape = 's32[1]{0}', space=sflag, size = 0x4, scoped, tag = 'scoped memory for tpu_custom_call.1']
    #allocation10 [shape = 'u8[16384]{0}', space=vmem, size = 0x4000, scoped, tag = 'output window, operand 0']
    #allocation11 [shape = 'u8[16384]{0}', space=vmem, size = 0x4000, scoped, tag = 'output window, operand 1']
    #allocation12 [shape = 's32[2]{0}', space=sflag, size = 0x8, scoped, tag = 'scoped memory for tpu_custom_call.1']
    %11 = vsyncpa [#allocation3], 0
    %s12 = scalar_lea.sflag [#allocation3], 1
    %13 = vsyncpa %s12, 0
    %14 = vsyncpa [#allocation6], 0
    %s15 = scalar_lea.sflag [#allocation6], 1
    %16 = vsyncpa %s15, 0
    %17 = vsyncpa [#allocation9], 0
    %18 = vsyncpa [#allocation4], 0
    %s19 = scalar_lea.sflag [#allocation4], 1
    %20 = vsyncpa %s19, 0
    %21 = vsyncpa [#allocation12], 0
    %s22 = scalar_lea.sflag [#allocation12], 1
    %23 = vsyncpa %s22, 0
    loop: start=0, step=1, limit=4
    $region2: #{tpu_custom_call.1} parent=1 // loop_pre_header
      _
    $region3: #{tpu_custom_call.1} parent=1 // loop_header
      %s25 = sphi 0, %s29
      %p26 = scmp.ge.s32.totalorder %s25, 4
      %s35 = sphi 0, %s37
      %s38 = sphi 0, %s35
      %s39 = sphi 0, %s38
      %s55 = sphi 0, %s39
      %s61 = sphi 0, %s63
      %s64 = sphi 0, %s61
      %s65 = sphi 0, %s64
      %s81 = sphi 0, %s65
      %s85 = sphi 0, %s85
      %s87 = sphi 0, %s85
      %s88 = sphi 0, %s87
      %s102 = sphi 0, %s88
      %s106 = sphi 0, %s106
      %s108 = sphi 0, %s106
      %s109 = sphi 0, %s108
      %s123 = sphi 0, %s109
      %s129 = sphi 0, %s131
      %s132 = sphi 0, %s129
      %s133 = sphi 0, %s132
      %s149 = sphi 0, %s133
      %s155 = sphi 0, %s157
      %s158 = sphi 0, %s155
      %s159 = sphi 0, %s158
      %s175 = sphi 0, %s159
    $region4: #{tpu_custom_call.1} parent=1 // loop_header_branch
      %28 = sbr.rel (%p26) target = $region8
    $region5: #{tpu_custom_call.1} parent=1 // loop_body
      %s30 = ssub.s32 %s25, 1
      %s31 = ssub.s32 %s25, 2
      %s32 = sadd.s32 %s25, 1
      %s33 = ssub.s32 %s25, %s32
      %p34 = scmp.eq.s32.totalorder %s33, 0
      %s36 = sadd.s32 %s35, 1
      %s37 = scalar_select %p34, %s35, %s36
      %p40 = pneg %p34
      %p41 = scmp.eq.s32.totalorder %s25, 1
      %p42 = por %p40, %p41
      %p43 = scmp.ne.s32.totalorder %s35, %s38
      %p44 = scmp.eq.s32.totalorder %s25, 0
      %p45 = por %p43, %p44
      %p46 = scmp.ne.s32.totalorder %s35, %s38
      %p47 = scmp.eq.s32.totalorder %s30, 1
      %p48 = por %p46, %p47
      %p49 = scmp.ne.s32.totalorder %s38, %s39
      %p50 = scmp.eq.s32.totalorder %s30, 0
      %p51 = por %p49, %p50
      %p52 = scmp.ne.s32.totalorder %s38, %s39
      %p53 = scmp.eq.s32.totalorder %s31, 1
      %p54 = por %p52, %p53
      %p56 = scmp.ne.s32.totalorder %s39, %s55
      %p57 = scmp.eq.s32.totalorder %s31, 0
      %p58 = por %p56, %p57
      %s59 = ssub.s32 %s25, %s32
      %p60 = scmp.eq.s32.totalorder %s59, 0
      %s62 = sadd.s32 %s61, 1
      %s63 = scalar_select %p60, %s61, %s62
      %p66 = pneg %p60
      %p67 = scmp.eq.s32.totalorder %s25, 1
      %p68 = por %p66, %p67
      %p69 = scmp.ne.s32.totalorder %s61, %s64
      %p70 = scmp.eq.s32.totalorder %s25, 0
      %p71 = por %p69, %p70
      %p72 = scmp.ne.s32.totalorder %s61, %s64
      %p73 = scmp.eq.s32.totalorder %s30, 1
      %p74 = por %p72, %p73
      %p75 = scmp.ne.s32.totalorder %s64, %s65
      %p76 = scmp.eq.s32.totalorder %s30, 0
      %p77 = por %p75, %p76
      %p78 = scmp.ne.s32.totalorder %s64, %s65
      %p79 = scmp.eq.s32.totalorder %s31, 1
      %p80 = por %p78, %p79
      %p82 = scmp.ne.s32.totalorder %s65, %s81
      %p83 = scmp.eq.s32.totalorder %s31, 0
      %p84 = por %p82, %p83
      %s86 = sadd.s32 %s85, 1
      %p89 = scmp.eq.s32.totalorder %s25, 1
      %p90 = scmp.ne.s32.totalorder %s85, %s87
      %p91 = scmp.eq.s32.totalorder %s25, 0
      %p92 = por %p90, %p91
      %p93 = scmp.ne.s32.totalorder %s85, %s87
      %p94 = scmp.eq.s32.totalorder %s30, 1
      %p95 = por %p93, %p94
      %p96 = scmp.ne.s32.totalorder %s87, %s88
      %p97 = scmp.eq.s32.totalorder %s30, 0
      %p98 = por %p96, %p97
      %p99 = scmp.ne.s32.totalorder %s87, %s88
      %p100 = scmp.eq.s32.totalorder %s31, 1
      %p101 = por %p99, %p100
      %p103 = scmp.ne.s32.totalorder %s88, %s102
      %p104 = scmp.eq.s32.totalorder %s31, 0
      %p105 = por %p103, %p104
      %s107 = sadd.s32 %s106, 1
      %p110 = scmp.eq.s32.totalorder %s25, 1
      %p111 = scmp.ne.s32.totalorder %s106, %s108
      %p112 = scmp.eq.s32.totalorder %s25, 0
      %p113 = por %p111, %p112
      %p114 = scmp.ne.s32.totalorder %s106, %s108
      %p115 = scmp.eq.s32.totalorder %s30, 1
      %p116 = por %p114, %p115
      %p117 = scmp.ne.s32.totalorder %s108, %s109
      %p118 = scmp.eq.s32.totalorder %s30, 0
      %p119 = por %p117, %p118
      %p120 = scmp.ne.s32.totalorder %s108, %s109
      %p121 = scmp.eq.s32.totalorder %s31, 1
      %p122 = por %p120, %p121
      %p124 = scmp.ne.s32.totalorder %s109, %s123
      %p125 = scmp.eq.s32.totalorder %s31, 0
      %p126 = por %p124, %p125
      %s127 = ssub.s32 %s25, %s32
      %p128 = scmp.eq.s32.totalorder %s127, 0
      %s130 = sadd.s32 %s129, 1
      %s131 = scalar_select %p128, %s129, %s130
      %p134 = pneg %p128
      %p135 = scmp.eq.s32.totalorder %s25, 1
      %p136 = por %p134, %p135
      %p137 = scmp.ne.s32.totalorder %s129, %s132
      %p138 = scmp.eq.s32.totalorder %s25, 0
      %p139 = por %p137, %p138
      %p140 = scmp.ne.s32.totalorder %s129, %s132
      %p141 = scmp.eq.s32.totalorder %s30, 1
      %p142 = por %p140, %p141
      %p143 = scmp.ne.s32.totalorder %s132, %s133
      %p144 = scmp.eq.s32.totalorder %s30, 0
      %p145 = por %p143, %p144
      %p146 = scmp.ne.s32.totalorder %s132, %s133
      %p147 = scmp.eq.s32.totalorder %s31, 1
      %p148 = por %p146, %p147
      %p150 = scmp.ne.s32.totalorder %s133, %s149
      %p151 = scmp.eq.s32.totalorder %s31, 0
      %p152 = por %p150, %p151
      %s153 = ssub.s32 %s25, %s32
      %p154 = scmp.eq.s32.totalorder %s153, 0
      %s156 = sadd.s32 %s155, 1
      %s157 = scalar_select %p154, %s155, %s156
      %p160 = pneg %p154
      %p161 = scmp.eq.s32.totalorder %s25, 1
      %p162 = por %p160, %p161
      %p163 = scmp.ne.s32.totalorder %s155, %s158
      %p164 = scmp.eq.s32.totalorder %s25, 0
      %p165 = por %p163, %p164
      %p166 = scmp.ne.s32.totalorder %s155, %s158
      %p167 = scmp.eq.s32.totalorder %s30, 1
      %p168 = por %p166, %p167
      %p169 = scmp.ne.s32.totalorder %s158, %s159
      %p170 = scmp.eq.s32.totalorder %s30, 0
      %p171 = por %p169, %p170
      %p172 = scmp.ne.s32.totalorder %s158, %s159
      %p173 = scmp.eq.s32.totalorder %s31, 1
      %p174 = por %p172, %p173
      %p176 = scmp.ne.s32.totalorder %s159, %s175
      %p177 = scmp.eq.s32.totalorder %s31, 0
      %p178 = por %p176, %p177
      %p179 = scmp.le.s32.totalorder 1, %s25
      %p180 = scmp.lt.s32.totalorder %s25, 3
      %p181 = pnand %p179, %p180
      %p182 = pneg %p181
      // Predicated region
      $region9: #{tpu_custom_call.1} parent=5 // pred_check
        _
      $region10: #{tpu_custom_call.1} parent=5 // pred_check_branch
        %184 = sbr.rel (%p181) target = $region12
      $region11: #{tpu_custom_call.1} parent=5 // pred_region
        %s185 = ssub.s32 %s25, 1
        // Predicated region
        $region13: #{tpu_custom_call.1} parent=11 // pred_check
          %p186 = pneg %p98
        $region14: #{tpu_custom_call.1} parent=11 // pred_check_branch
          %188 = sbr.rel (%p186) target = $region16
        $region15: #{tpu_custom_call.1} parent=11 // pred_region
          %s190 = ssub.s32 22528, 22528
          %191 = vsyncadd [#allocation6], %s190
          %s192 = sshll.u32 [#allocation7], 4
          %s193 = int_to_ptr.vmem [resolvable:$true] %s192
          %198 = dma.hbm_to_vmem [thread:$0]  %s2, 22528, %s193, [#allocation6], 256, 256, 16
        $region16: #{tpu_custom_call.1} parent=11 // pred_fallthru
          _
        // Predicated region
        $region17: #{tpu_custom_call.1} parent=11 // pred_check
          %p199 = pneg %p119
        $region18: #{tpu_custom_call.1} parent=11 // pred_check_branch
          %201 = sbr.rel (%p199) target = $region20
        $region19: #{tpu_custom_call.1} parent=11 // pred_region
          %s203 = ssub.s32 256, 256
          %204 = vsyncadd [#allocation9], %s203
          %s206 = sshll.u32 [#allocation8], 4
          %s207 = int_to_ptr.vmem [resolvable:$true] %s206
          %209 = dma.hbm_to_vmem [thread:$0]  %s3, 256, %s207, [#allocation9]
        $region20: #{tpu_custom_call.1} parent=11 // pred_fallthru
          _
      $region12: #{tpu_custom_call.1} parent=5 // pred_fallthru
        _
      %p210 = scmp.lt.s32.totalorder %s25, 2
      // Predicated region
      $region21: #{tpu_custom_call.1} parent=5 // pred_check
        %p211 = pneg %p210
      $region22: #{tpu_custom_call.1} parent=5 // pred_check_branch
        %213 = sbr.rel (%p211) target = $region24
      $region23: #{tpu_custom_call.1} parent=5 // pred_region
        // Predicated region
        $region25: #{tpu_custom_call.1} parent=23 // pred_check
          %p214 = pneg %p45
        $region26: #{tpu_custom_call.1} parent=23 // pred_check_branch
          %216 = sbr.rel (%p214) target = $region28
        $region27: #{tpu_custom_call.1} parent=23 // pred_region
          %s217 = sand.u32 %s35, 1
          %s218 = scalar_lea.sflag [#allocation3], %s217
          %s219 = sand.u32 %s35, 1
          %s220 = smul.addr %s219, 16
          %s221 = scalar_lea.vmem [#allocation2], %s220
          %s223 = ssub.s32 256, 256
          %224 = vsyncadd %s218, %s223
          %s225 = smul.addr %s25, 2
          %s226 = smul.addr %s225, 128
          %s227 = scalar_lea.hbm %s0, %s226
          %s229 = sshll.u32 %s221, 4
          %s230 = int_to_ptr.vmem [resolvable:$true] %s229
          %232 = dma.hbm_to_vmem [thread:$0]  %s227, 256, %s230, %s218
        $region28: #{tpu_custom_call.1} parent=23 // pred_fallthru
          _
        // Predicated region
        $region29: #{tpu_custom_call.1} parent=23 // pred_check
          %p233 = pneg %p71
        $region30: #{tpu_custom_call.1} parent=23 // pred_check_branch
          %235 = sbr.rel (%p233) target = $region32
        $region31: #{tpu_custom_call.1} parent=23 // pred_region
          %s236 = sand.u32 %s25, 1
          %s237 = scalar_lea.sflag [#allocation6], %s236
          %s238 = sand.u32 %s61, 1
          %s239 = smul.addr %s238, 8
          %s240 = scalar_lea.vmem [#allocation5], %s239
          %s242 = ssub.s32 128, 128
          %243 = vsyncadd %s237, %s242
          %s244 = smul.addr %s25, 128
          %s245 = scalar_lea.hbm %s1, %s244
          %s247 = sshll.u32 %s240, 4
          %s248 = int_to_ptr.vmem [resolvable:$true] %s247
          %250 = dma.hbm_to_vmem [thread:$0]  %s245, 128, %s248, %s237
        $region32: #{tpu_custom_call.1} parent=23 // pred_fallthru
          _
      $region24: #{tpu_custom_call.1} parent=5 // pred_fallthru
        _
      %p251 = scmp.le.s32.totalorder 1, %s25
      %p252 = scmp.lt.s32.totalorder %s25, 3
      %p253 = pnand %p251, %p252
      %p254 = pneg %p253
      // Predicated region
      $region33: #{tpu_custom_call.1} parent=5 // pred_check
        _
      $region34: #{tpu_custom_call.1} parent=5 // pred_check_branch
        %256 = sbr.rel (%p253) target = $region36
      $region35: #{tpu_custom_call.1} parent=5 // pred_region
        %s257 = ssub.s32 %s25, 1
        %s258 = sand.u32 %s38, 1
        %s259 = scalar_lea.sflag [#allocation3], %s258
        %s260 = sand.u32 %s38, 1
        %s261 = smul.addr %s260, 16
        %s262 = scalar_lea.vmem [#allocation2], %s261
        // Predicated region
        $region37: #{tpu_custom_call.1} parent=35 // pred_check
          %p263 = pneg %p51
        $region38: #{tpu_custom_call.1} parent=35 // pred_check_branch
          %265 = sbr.rel (%p263) target = $region40
        $region39: #{tpu_custom_call.1} parent=35 // pred_region
          %266 = dma.done %s259, 256
        $region40: #{tpu_custom_call.1} parent=35 // pred_fallthru
          _
        %s267 = sand.u32 %s30, 1
        %s268 = scalar_lea.sflag [#allocation6], %s267
        %s269 = sand.u32 %s64, 1
        %s270 = smul.addr %s269, 8
        %s271 = scalar_lea.vmem [#allocation5], %s270
        // Predicated region
        $region41: #{tpu_custom_call.1} parent=35 // pred_check
          %p272 = pneg %p77
        $region42: #{tpu_custom_call.1} parent=35 // pred_check_branch
          %274 = sbr.rel (%p272) target = $region44
        $region43: #{tpu_custom_call.1} parent=35 // pred_region
          %275 = dma.done %s268, 128
        $region44: #{tpu_custom_call.1} parent=35 // pred_fallthru
          _
        // Predicated region
        $region45: #{tpu_custom_call.1} parent=35 // pred_check
          %p276 = pneg %p98
        $region46: #{tpu_custom_call.1} parent=35 // pred_check_branch
          %278 = sbr.rel (%p276) target = $region48
        $region47: #{tpu_custom_call.1} parent=35 // pred_region
          %279 = dma.done [#allocation6], 22528
        $region48: #{tpu_custom_call.1} parent=35 // pred_fallthru
          _
        // Predicated region
        $region49: #{tpu_custom_call.1} parent=35 // pred_check
          %p280 = pneg %p119
        $region50: #{tpu_custom_call.1} parent=35 // pred_check_branch
          %282 = sbr.rel (%p280) target = $region52
        $region51: #{tpu_custom_call.1} parent=35 // pred_region
          %283 = dma.done [#allocation9], 256
        $region52: #{tpu_custom_call.1} parent=35 // pred_fallthru
          _
        %s284 = sand.u32 %s38, 1
        %s285 = scalar_lea.sflag [#allocation3], %s284
        %s286 = sand.u32 %s38, 1
        %s287 = smul.addr %s286, 16
        %s288 = scalar_lea.vmem [#allocation2], %s287
        %p289 = pneg %p51
        %p290 = pneg %p48
        %s291 = sand.u32 %s30, 1
        %s292 = scalar_lea.sflag [#allocation6], %s291
        %s293 = sand.u32 %s64, 1
        %s294 = smul.addr %s293, 8
        %s295 = scalar_lea.vmem [#allocation5], %s294
        %p296 = pneg %p77
        %p297 = pneg %p74
        %p298 = pneg %p98
        %p299 = pneg %p95
        %p300 = pneg %p119
        %p301 = pneg %p116
        %p302 = pneg %p145
        %p303 = pneg %p142
        %s304 = sand.u32 %s132, 1
        %s305 = scalar_lea.sflag [#allocation4], %s304
        %s306 = sand.u32 %s132, 1
        %s307 = smul.addr %s306, 16
        %s308 = scalar_lea.vmem [#allocation10], %s307
        %p309 = pneg %p171
        %p310 = pneg %p168
        %s311 = sand.u32 %s158, 1
        %s312 = scalar_lea.sflag [#allocation12], %s311
        %s313 = sand.u32 %s158, 1
        %s314 = smul.addr %s313, 16
        %s315 = scalar_lea.vmem [#allocation11], %s314
        %v316 = vld [vmem:[#allocation8] sm:$0xff]
        %v317 = vld [vmem:[#allocation8 + $0x8] sm:$0xff]
        %v318 = vld [vmem:[%s262] sm:$0xff]
        %v319 = vld [vmem:[%s262 + $0x8] sm:$0xff]
        %v320 = vld [vmem:[#allocation7] sm:$0xff]
        %v321 = vld [vmem:[#allocation7 + $0x10] sm:$0xff]
        %v322 = vld [vmem:[#allocation7 + $0x20] sm:$0xff]
        %v323 = vld [vmem:[#allocation7 + $0x30] sm:$0xff]
        %v324 = vld [vmem:[#allocation7 + $0x40] sm:$0xff]
        %v325 = vld [vmem:[#allocation7 + $0x50] sm:$0xff]
        %v326 = vld [vmem:[#allocation7 + $0x60] sm:$0xff]
        %v327 = vld [vmem:[#allocation7 + $0x70] sm:$0xff]
        %v328 = vld [vmem:[#allocation7 + $0x80] sm:$0xff]
        %v329 = vld [vmem:[#allocation7 + $0x90] sm:$0xff]
        %v330 = vld [vmem:[#allocation7 + $0xa0] sm:$0xff]
        %v331 = vld [vmem:[#allocation7 + $0xb0] sm:$0xff]
        %v332 = vld [vmem:[#allocation7 + $0xc0] sm:$0xff]
        %v333 = vld [vmem:[#allocation7 + $0xd0] sm:$0xff]
        %v334 = vld [vmem:[#allocation7 + $0xe0] sm:$0xff]
        %v335 = vld [vmem:[#allocation7 + $0xf0] sm:$0xff]
        %v336 = vld [vmem:[#allocation7 + $0x100] sm:$0xff]
        %v337 = vld [vmem:[#allocation7 + $0x110] sm:$0xff]
        %v338 = vld [vmem:[#allocation7 + $0x120] sm:$0xff]
        %v339 = vld [vmem:[#allocation7 + $0x130] sm:$0xff]
        %v340 = vld [vmem:[#allocation7 + $0x140] sm:$0xff]
        %v341 = vld [vmem:[#allocation7 + $0x150] sm:$0xff]
        %v342 = vld [vmem:[#allocation7 + $0x160] sm:$0xff]
        %v343 = vld [vmem:[#allocation7 + $0x170] sm:$0xff]
        %v344 = vld [vmem:[#allocation7 + $0x180] sm:$0xff]
        %v345 = vld [vmem:[#allocation7 + $0x190] sm:$0xff]
        %v346 = vld [vmem:[#allocation7 + $0x1a0] sm:$0xff]
        %v347 = vld [vmem:[#allocation7 + $0x1b0] sm:$0xff]
        %v348 = vld [vmem:[#allocation7 + $0x1c0] sm:$0xff]
        %v349 = vld [vmem:[#allocation7 + $0x1d0] sm:$0xff]
        %v350 = vld [vmem:[#allocation7 + $0x1e0] sm:$0xff]
        %v351 = vld [vmem:[#allocation7 + $0x1f0] sm:$0xff]
        %v352 = vlaneseq
        %v353 = vshrl.u32 %v352, 7
        %v354 = vsub.s32 0, %v353
        %v355 = vrot.slane %v316, %v354
        %356 = vmatprep.subr.mxu0 0.0
        %357 = vmatpush1.msra.mxu0 %v320
        %358 = vmatprep.subr.mxu0 0.0
        %359 = vmatpush1.msra.mxu0 %v321
        %360 = vmatprep.subr.mxu0 0.0
        %361 = vmatpush1.msra.mxu0 %v322
        %362 = vmatprep.subr.mxu0 0.0
        %363 = vmatpush1.msra.mxu0 %v323
        %364 = vmatprep.subr.mxu0 0.0
        %365 = vmatpush1.msra.mxu0 %v324
        %366 = vmatprep.subr.mxu0 0.0
        %367 = vmatpush1.msra.mxu0 %v325
        %368 = vmatprep.subr.mxu0 0.0
        %369 = vmatpush1.msra.mxu0 %v326
        %370 = vmatprep.subr.mxu0 0.0
        %371 = vmatpush1.msra.mxu0 %v327
        %372 = vmatprep.subr.mxu0 0.0
        %373 = vmatpush1.msra.mxu0 %v328
        %374 = vmatprep.subr.mxu0 0.0
        %375 = vmatpush1.msra.mxu0 %v329
        %376 = vmatprep.subr.mxu0 0.0
        %377 = vmatpush1.msra.mxu0 %v330
        %378 = vmatprep.subr.mxu0 0.0
        %379 = vmatpush1.msra.mxu0 %v331
        %380 = vmatprep.subr.mxu0 0.0
        %381 = vmatpush1.msra.mxu0 %v332
        %382 = vmatprep.subr.mxu0 0.0
        %383 = vmatpush1.msra.mxu0 %v333
        %384 = vmatprep.subr.mxu0 0.0
        %385 = vmatpush1.msra.mxu0 %v334
        %386 = vmatprep.subr.mxu0 0.0
        %387 = vmatpush1.msra.mxu0 %v335
        %388 = vmatprep.subr.mxu0 0.0
        %389 = vmatpush1.msra.mxu0 %v336
        %390 = vmatprep.subr.mxu0 0.0
        %391 = vmatpush1.msra.mxu0 %v337
        %392 = vmatprep.subr.mxu0 0.0
        %393 = vmatpush1.msra.mxu0 %v338
        %394 = vmatprep.subr.mxu0 0.0
        %395 = vmatpush1.msra.mxu0 %v339
        %396 = vmatprep.subr.mxu0 0.0
        %397 = vmatpush1.msra.mxu0 %v340
        %398 = vmatprep.subr.mxu0 0.0
        %399 = vmatpush1.msra.mxu0 %v341
        %400 = vmatprep.subr.mxu0 0.0
        %401 = vmatpush1.msra.mxu0 %v342
        %402 = vmatprep.subr.mxu0 0.0
        %403 = vmatpush1.msra.mxu0 %v343
        %404 = vmatprep.subr.mxu0 0.0
        %405 = vmatpush1.msra.mxu0 %v344
        %406 = vmatprep.subr.mxu0 0.0
        %407 = vmatpush1.msra.mxu0 %v345
        %408 = vmatprep.subr.mxu0 0.0
        %409 = vmatpush1.msra.mxu0 %v346
        %410 = vmatprep.subr.mxu0 0.0
        %411 = vmatpush1.msra.mxu0 %v347
        %412 = vmatprep.subr.mxu0 0.0
        %413 = vmatpush1.msra.mxu0 %v348
        %414 = vmatprep.subr.mxu0 0.0
        %415 = vmatpush1.msra.mxu0 %v349
        %416 = vmatprep.subr.mxu0 0.0
        %417 = vmatpush1.msra.mxu0 %v350
        %418 = vmatprep.subr.mxu0 0.0
        %419 = vmatpush1.msra.mxu0 %v351
        %420 = vmatprep.mubr.f32.mxu0 %v319
        %421 = vmatmul.mubr.f32.gmra.mrb[0].mxu0 %v318
        %v422 = vpop.f32.mrb[0].mxu0
        %v423 = vadd.f32 %v355, %v422
        %v424 = vpop.f32.mrb[0].mxu0
        %425 = vdwg.mxu0
        %v426 = vmax.f32 %v423, 0.0
        %v427 = vld [vmem:[#allocation7 + $0x200] sm:$0xff]
        %v428 = vld [vmem:[#allocation7 + $0x210] sm:$0xff]
        %v429 = vld [vmem:[#allocation7 + $0x220] sm:$0xff]
        %v430 = vld [vmem:[#allocation7 + $0x230] sm:$0xff]
        %v431 = vld [vmem:[#allocation7 + $0x240] sm:$0xff]
        %v432 = vld [vmem:[#allocation7 + $0x250] sm:$0xff]
        %v433 = vld [vmem:[#allocation7 + $0x260] sm:$0xff]
        %v434 = vld [vmem:[#allocation7 + $0x270] sm:$0xff]
        %v435 = vld [vmem:[#allocation7 + $0x280] sm:$0xff]
        %v436 = vld [vmem:[#allocation7 + $0x290] sm:$0xff]
        %v437 = vld [vmem:[#allocation7 + $0x2a0] sm:$0xff]
        %v438 = vld [vmem:[#allocation7 + $0x2b0] sm:$0xff]
        %v439 = vld [vmem:[#allocation7 + $0x2c0] sm:$0xff]
        %v440 = vld [vmem:[#allocation7 + $0x2d0] sm:$0xff]
        %v441 = vld [vmem:[#allocation7 + $0x2e0] sm:$0xff]
        %v442 = vld [vmem:[#allocation7 + $0x2f0] sm:$0xff]
        %v443 = vlaneseq
        %v444 = vshrl.u32 %v443, 7
        %v445 = vsub.s32 1, %v444
        %v446 = vrot.slane %v316, %v445
        %447 = vmatprep.subr.mxu0 0.0
        %448 = vmatpush1.msra.mxu0 %v427
        %449 = vmatprep.subr.mxu0 0.0
        %450 = vmatpush1.msra.mxu0 %v428
        %451 = vmatprep.subr.mxu0 0.0
        %452 = vmatpush1.msra.mxu0 %v429
        %453 = vmatprep.subr.mxu0 0.0
        %454 = vmatpush1.msra.mxu0 %v430
        %455 = vmatprep.subr.mxu0 0.0
        %456 = vmatpush1.msra.mxu0 %v431
        %457 = vmatprep.subr.mxu0 0.0
        %458 = vmatpush1.msra.mxu0 %v432
        %459 = vmatprep.subr.mxu0 0.0
        %460 = vmatpush1.msra.mxu0 %v433
        %461 = vmatprep.subr.mxu0 0.0
        %462 = vmatpush1.msra.mxu0 %v434
        %463 = vmatprep.subr.mxu0 0.0
        %464 = vmatpush1.msra.mxu0 %v435
        %465 = vmatprep.subr.mxu0 0.0
        %466 = vmatpush1.msra.mxu0 %v436
        %467 = vmatprep.subr.mxu0 0.0
        %468 = vmatpush1.msra.mxu0 %v437
        %469 = vmatprep.subr.mxu0 0.0
        %470 = vmatpush1.msra.mxu0 %v438
        %471 = vmatprep.subr.mxu0 0.0
        %472 = vmatpush1.msra.mxu0 %v439
        %473 = vmatprep.subr.mxu0 0.0
        %474 = vmatpush1.msra.mxu0 %v440
        %475 = vmatprep.subr.mxu0 0.0
        %476 = vmatpush1.msra.mxu0 %v441
        %477 = vmatprep.subr.mxu0 0.0
        %478 = vmatpush1.msra.mxu0 %v442
        %479 = vmatprep.subr.mxu0 0.0
        %480 = vmatpush1.msra.mxu0 0.0
        %481 = vmatprep.subr.mxu0 0.0
        %482 = vmatpush1.msra.mxu0 0.0
        %483 = vmatprep.subr.mxu0 0.0
        %484 = vmatpush1.msra.mxu0 0.0
        %485 = vmatprep.subr.mxu0 0.0
        %486 = vmatpush1.msra.mxu0 0.0
        %487 = vmatprep.subr.mxu0 0.0
        %488 = vmatpush1.msra.mxu0 0.0
        %489 = vmatprep.subr.mxu0 0.0
        %490 = vmatpush1.msra.mxu0 0.0
        %491 = vmatprep.subr.mxu0 0.0
        %492 = vmatpush1.msra.mxu0 0.0
        %493 = vmatprep.subr.mxu0 0.0
        %494 = vmatpush1.msra.mxu0 0.0
        %495 = vmatprep.subr.mxu0 0.0
        %496 = vmatpush1.msra.mxu0 0.0
        %497 = vmatprep.subr.mxu0 0.0
        %498 = vmatpush1.msra.mxu0 0.0
        %499 = vmatprep.subr.mxu0 0.0
        %500 = vmatpush1.msra.mxu0 0.0
        %501 = vmatprep.subr.mxu0 0.0
        %502 = vmatpush1.msra.mxu0 0.0
        %503 = vmatprep.subr.mxu0 0.0
        %504 = vmatpush1.msra.mxu0 0.0
        %505 = vmatprep.subr.mxu0 0.0
        %506 = vmatpush1.msra.mxu0 0.0
        %507 = vmatprep.subr.mxu0 0.0
        %508 = vmatpush1.msra.mxu0 0.0
        %509 = vmatprep.subr.mxu0 0.0
        %510 = vmatpush1.msra.mxu0 0.0
        %511 = vmatprep.mubr.f32.mxu0 0.0
        %512 = vmatmul.mubr.f32.gmra.mrb[0].mxu0 %v426
        %v513 = vpop.f32.mrb[0].mxu0
        %v514 = vadd.f32 %v446, %v513
        %v515 = vpop.f32.mrb[0].mxu0
        %516 = vdwg.mxu0
        %v517 = vmax.f32 %v514, 0.0
        %v518 = vld [vmem:[#allocation7 + $0x300] sm:$0xff]
        %v519 = vld [vmem:[#allocation7 + $0x308] sm:$0xff]
        %v520 = vld [vmem:[#allocation7 + $0x310] sm:$0xff]
        %v521 = vld [vmem:[#allocation7 + $0x318] sm:$0xff]
        %v522 = vld [vmem:[#allocation7 + $0x320] sm:$0xff]
        %v523 = vld [vmem:[#allocation7 + $0x328] sm:$0xff]
        %v524 = vld [vmem:[#allocation7 + $0x330] sm:$0xff]
        %v525 = vld [vmem:[#allocation7 + $0x338] sm:$0xff]
        %v526 = vlaneseq
        %v527 = vshrl.u32 %v526, 7
        %v528 = vsub.s32 2, %v527
        %v529 = vrot.slane %v316, %v528
        %v530 = vlaneseq
        %v531 = vshrl.u32 %v530, 7
        %v532 = vsub.s32 2, %v531
        %v533 = vrot.slane %v317, %v532
        %vm534 = vcmask 261120
        %v536 = vsel %vm534, %v517, 0
        %538 = vmatprep.subr.mxu0 %v519
        %539 = vmatpush1.msra.mxu0 %v518
        %540 = vmatprep.subr.mxu0 %v521
        %541 = vmatpush1.msra.mxu0 %v520
        %542 = vmatprep.subr.mxu0 %v523
        %543 = vmatpush1.msra.mxu0 %v522
        %544 = vmatprep.subr.mxu0 %v525
        %545 = vmatpush1.msra.mxu0 %v524
        %546 = vmatprep.subr.mxu0 0.0
        %547 = vmatpush1.msra.mxu0 0.0
        %548 = vmatprep.subr.mxu0 0.0
        %549 = vmatpush1.msra.mxu0 0.0
        %550 = vmatprep.subr.mxu0 0.0
        %551 = vmatpush1.msra.mxu0 0.0
        %552 = vmatprep.subr.mxu0 0.0
        %553 = vmatpush1.msra.mxu0 0.0
        %554 = vmatprep.subr.mxu0 0.0
        %555 = vmatpush1.msra.mxu0 0.0
        %556 = vmatprep.subr.mxu0 0.0
        %557 = vmatpush1.msra.mxu0 0.0
        %558 = vmatprep.subr.mxu0 0.0
        %559 = vmatpush1.msra.mxu0 0.0
        %560 = vmatprep.subr.mxu0 0.0
        %561 = vmatpush1.msra.mxu0 0.0
        %562 = vmatprep.subr.mxu0 0.0
        %563 = vmatpush1.msra.mxu0 0.0
        %564 = vmatprep.subr.mxu0 0.0
        %565 = vmatpush1.msra.mxu0 0.0
        %566 = vmatprep.subr.mxu0 0.0
        %567 = vmatpush1.msra.mxu0 0.0
        %568 = vmatprep.subr.mxu0 0.0
        %569 = vmatpush1.msra.mxu0 0.0
        %570 = vmatprep.subr.mxu0 0.0
        %571 = vmatpush1.msra.mxu0 0.0
        %572 = vmatprep.subr.mxu0 0.0
        %573 = vmatpush1.msra.mxu0 0.0
        %574 = vmatprep.subr.mxu0 0.0
        %575 = vmatpush1.msra.mxu0 0.0
        %576 = vmatprep.subr.mxu0 0.0
        %577 = vmatpush1.msra.mxu0 0.0
        %578 = vmatprep.subr.mxu0 0.0
        %579 = vmatpush1.msra.mxu0 0.0
        %580 = vmatprep.subr.mxu0 0.0
        %581 = vmatpush1.msra.mxu0 0.0
        %582 = vmatprep.subr.mxu0 0.0
        %583 = vmatpush1.msra.mxu0 0.0
        %584 = vmatprep.subr.mxu0 0.0
        %585 = vmatpush1.msra.mxu0 0.0
        %586 = vmatprep.subr.mxu0 0.0
        %587 = vmatpush1.msra.mxu0 0.0
        %588 = vmatprep.subr.mxu0 0.0
        %589 = vmatpush1.msra.mxu0 0.0
        %590 = vmatprep.subr.mxu0 0.0
        %591 = vmatpush1.msra.mxu0 0.0
        %592 = vmatprep.subr.mxu0 0.0
        %593 = vmatpush1.msra.mxu0 0.0
        %594 = vmatprep.subr.mxu0 0.0
        %595 = vmatpush1.msra.mxu0 0.0
        %596 = vmatprep.subr.mxu0 0.0
        %597 = vmatpush1.msra.mxu0 0.0
        %598 = vmatprep.subr.mxu0 0.0
        %599 = vmatpush1.msra.mxu0 0.0
        %600 = vmatprep.subr.mxu0 0.0
        %601 = vmatpush1.msra.mxu0 0.0
        %602 = vmatprep.mubr.f32.mxu0 0.0
        %603 = vmatmul.mubr.f32.gmra.mrb[0].mxu0 %v536
        %v604 = vpop.f32.mrb[0].mxu0
        %v605 = vadd.f32 %v529, %v604
        %v606 = vpop.f32.mrb[0].mxu0
        %v607 = vadd.f32 %v533, %v606
        %608 = vdwg.mxu0
        %v609 = vld [vmem:[%s271] sm:$0xff]
        %v610 = vmul.f32 %v607, 0.5
        %v611 = vmul.f32 %v610, 1.442695
        %v612 = vpow.pop %v611
        %v613 = vmul.f32 %v609, %v612
        %v614 = vadd.f32 %v605, %v613
        %v615 = vld [vmem:[#allocation7 + $0x340] sm:$0xff]
        %v616 = vld [vmem:[#allocation7 + $0x350] sm:$0xff]
        %v617 = vld [vmem:[#allocation7 + $0x360] sm:$0xff]
        %v618 = vld [vmem:[#allocation7 + $0x370] sm:$0xff]
        %v619 = vld [vmem:[#allocation7 + $0x380] sm:$0xff]
        %v620 = vld [vmem:[#allocation7 + $0x390] sm:$0xff]
        %v621 = vld [vmem:[#allocation7 + $0x3a0] sm:$0xff]
        %v622 = vld [vmem:[#allocation7 + $0x3b0] sm:$0xff]
        %v623 = vld [vmem:[#allocation7 + $0x3c0] sm:$0xff]
        %v624 = vld [vmem:[#allocation7 + $0x3d0] sm:$0xff]
        %v625 = vld [vmem:[#allocation7 + $0x3e0] sm:$0xff]
        %v626 = vld [vmem:[#allocation7 + $0x3f0] sm:$0xff]
        %v627 = vld [vmem:[#allocation7 + $0x400] sm:$0xff]
        %v628 = vld [vmem:[#allocation7 + $0x410] sm:$0xff]
        %v629 = vld [vmem:[#allocation7 + $0x420] sm:$0xff]
        %v630 = vld [vmem:[#allocation7 + $0x430] sm:$0xff]
        %v631 = vlaneseq
        %v632 = vshrl.u32 %v631, 7
        %v633 = vsub.s32 3, %v632
        %v634 = vrot.slane %v316, %v633
        %635 = vmatprep.subr.mxu0 0.0
        %636 = vmatpush1.msra.mxu0 %v615
        %637 = vmatprep.subr.mxu0 0.0
        %638 = vmatpush1.msra.mxu0 %v616
        %639 = vmatprep.subr.mxu0 0.0
        %640 = vmatpush1.msra.mxu0 %v617
        %641 = vmatprep.subr.mxu0 0.0
        %642 = vmatpush1.msra.mxu0 %v618
        %643 = vmatprep.subr.mxu0 0.0
        %644 = vmatpush1.msra.mxu0 %v619
        %645 = vmatprep.subr.mxu0 0.0
        %646 = vmatpush1.msra.mxu0 %v620
        %647 = vmatprep.subr.mxu0 0.0
        %648 = vmatpush1.msra.mxu0 %v621
        %649 = vmatprep.subr.mxu0 0.0
        %650 = vmatpush1.msra.mxu0 %v622
        %651 = vmatprep.subr.mxu0 0.0
        %652 = vmatpush1.msra.mxu0 %v623
        %653 = vmatprep.subr.mxu0 0.0
        %654 = vmatpush1.msra.mxu0 %v624
        %655 = vmatprep.subr.mxu0 0.0
        %656 = vmatpush1.msra.mxu0 %v625
        %657 = vmatprep.subr.mxu0 0.0
        %658 = vmatpush1.msra.mxu0 %v626
        %659 = vmatprep.subr.mxu0 0.0
        %660 = vmatpush1.msra.mxu0 %v627
        %661 = vmatprep.subr.mxu0 0.0
        %662 = vmatpush1.msra.mxu0 %v628
        %663 = vmatprep.subr.mxu0 0.0
        %664 = vmatpush1.msra.mxu0 %v629
        %665 = vmatprep.subr.mxu0 0.0
        %666 = vmatpush1.msra.mxu0 %v630
        %667 = vmatprep.subr.mxu0 0.0
        %668 = vmatpush1.msra.mxu0 0.0
        %669 = vmatprep.subr.mxu0 0.0
        %670 = vmatpush1.msra.mxu0 0.0
        %671 = vmatprep.subr.mxu0 0.0
        %672 = vmatpush1.msra.mxu0 0.0
        %673 = vmatprep.subr.mxu0 0.0
        %674 = vmatpush1.msra.mxu0 0.0
        %675 = vmatprep.subr.mxu0 0.0
        %676 = vmatpush1.msra.mxu0 0.0
        %677 = vmatprep.subr.mxu0 0.0
        %678 = vmatpush1.msra.mxu0 0.0
        %679 = vmatprep.subr.mxu0 0.0
        %680 = vmatpush1.msra.mxu0 0.0
        %681 = vmatprep.subr.mxu0 0.0
        %682 = vmatpush1.msra.mxu0 0.0
        %683 = vmatprep.subr.mxu0 0.0
        %684 = vmatpush1.msra.mxu0 0.0
        %685 = vmatprep.subr.mxu0 0.0
        %686 = vmatpush1.msra.mxu0 0.0
        %687 = vmatprep.subr.mxu0 0.0
        %688 = vmatpush1.msra.mxu0 0.0
        %689 = vmatprep.subr.mxu0 0.0
        %690 = vmatpush1.msra.mxu0 0.0
        %691 = vmatprep.subr.mxu0 0.0
        %692 = vmatpush1.msra.mxu0 0.0
        %693 = vmatprep.subr.mxu0 0.0
        %694 = vmatpush1.msra.mxu0 0.0
        %695 = vmatprep.subr.mxu0 0.0
        %696 = vmatpush1.msra.mxu0 0.0
        %697 = vmatprep.subr.mxu0 0.0
        %698 = vmatpush1.msra.mxu0 0.0
        %699 = vmatprep.mubr.f32.mxu0 0.0
        %700 = vmatmul.mubr.f32.gmra.mrb[0].mxu0 %v614
        %v701 = vpop.f32.mrb[0].mxu0
        %v702 = vadd.f32 %v634, %v701
        %v703 = vpop.f32.mrb[0].mxu0
        %704 = vdwg.mxu0
        %v705 = vmax.f32 %v702, 0.0
        %v706 = vld [vmem:[#allocation7 + $0x440] sm:$0xff]
        %v707 = vld [vmem:[#allocation7 + $0x450] sm:$0xff]
        %v708 = vld [vmem:[#allocation7 + $0x460] sm:$0xff]
        %v709 = vld [vmem:[#allocation7 + $0x470] sm:$0xff]
        %v710 = vlaneseq
        %v711 = vshrl.u32 %v710, 7
        %v712 = vsub.s32 4, %v711
        %v713 = vrot.slane %v316, %v712
        %v715 = vsel %vm534, %v705, 0
        %717 = vmatprep.subr.mxu0 0.0
        %718 = vmatpush1.msra.mxu0 %v706
        %719 = vmatprep.subr.mxu0 0.0
        %720 = vmatpush1.msra.mxu0 %v707
        %721 = vmatprep.subr.mxu0 0.0
        %722 = vmatpush1.msra.mxu0 %v708
        %723 = vmatprep.subr.mxu0 0.0
        %724 = vmatpush1.msra.mxu0 %v709
        %725 = vmatprep.subr.mxu0 0.0
        %726 = vmatpush1.msra.mxu0 0.0
        %727 = vmatprep.subr.mxu0 0.0
        %728 = vmatpush1.msra.mxu0 0.0
        %729 = vmatprep.subr.mxu0 0.0
        %730 = vmatpush1.msra.mxu0 0.0
        %731 = vmatprep.subr.mxu0 0.0
        %732 = vmatpush1.msra.mxu0 0.0
        %733 = vmatprep.subr.mxu0 0.0
        %734 = vmatpush1.msra.mxu0 0.0
        %735 = vmatprep.subr.mxu0 0.0
        %736 = vmatpush1.msra.mxu0 0.0
        %737 = vmatprep.subr.mxu0 0.0
        %738 = vmatpush1.msra.mxu0 0.0
        %739 = vmatprep.subr.mxu0 0.0
        %740 = vmatpush1.msra.mxu0 0.0
        %741 = vmatprep.subr.mxu0 0.0
        %742 = vmatpush1.msra.mxu0 0.0
        %743 = vmatprep.subr.mxu0 0.0
        %744 = vmatpush1.msra.mxu0 0.0
        %745 = vmatprep.subr.mxu0 0.0
        %746 = vmatpush1.msra.mxu0 0.0
        %747 = vmatprep.subr.mxu0 0.0
        %748 = vmatpush1.msra.mxu0 0.0
        %749 = vmatprep.subr.mxu0 0.0
        %750 = vmatpush1.msra.mxu0 0.0
        %751 = vmatprep.subr.mxu0 0.0
        %752 = vmatpush1.msra.mxu0 0.0
        %753 = vmatprep.subr.mxu0 0.0
        %754 = vmatpush1.msra.mxu0 0.0
        %755 = vmatprep.subr.mxu0 0.0
        %756 = vmatpush1.msra.mxu0 0.0
        %757 = vmatprep.subr.mxu0 0.0
        %758 = vmatpush1.msra.mxu0 0.0
        %759 = vmatprep.subr.mxu0 0.0
        %760 = vmatpush1.msra.mxu0 0.0
        %761 = vmatprep.subr.mxu0 0.0
        %762 = vmatpush1.msra.mxu0 0.0
        %763 = vmatprep.subr.mxu0 0.0
        %764 = vmatpush1.msra.mxu0 0.0
        %765 = vmatprep.subr.mxu0 0.0
        %766 = vmatpush1.msra.mxu0 0.0
        %767 = vmatprep.subr.mxu0 0.0
        %768 = vmatpush1.msra.mxu0 0.0
        %769 = vmatprep.subr.mxu0 0.0
        %770 = vmatpush1.msra.mxu0 0.0
        %771 = vmatprep.subr.mxu0 0.0
        %772 = vmatpush1.msra.mxu0 0.0
        %773 = vmatprep.subr.mxu0 0.0
        %774 = vmatpush1.msra.mxu0 0.0
        %775 = vmatprep.subr.mxu0 0.0
        %776 = vmatpush1.msra.mxu0 0.0
        %777 = vmatprep.subr.mxu0 0.0
        %778 = vmatpush1.msra.mxu0 0.0
        %779 = vmatprep.subr.mxu0 0.0
        %780 = vmatpush1.msra.mxu0 0.0
        %781 = vmatprep.mubr.f32.mxu0 0.0
        %782 = vmatmul.mubr.f32.gmra.mrb[0].mxu0 %v715
        %v783 = vpop.f32.mrb[0].mxu0
        %v784 = vadd.f32 %v713, %v783
        %v785 = vpop.f32.mrb[0].mxu0
        %786 = vdwg.mxu0
        %v787 = vmax.f32 %v784, 0.0
        %v788 = vld [vmem:[#allocation7 + $0x480] sm:$0xff]
        %v789 = vld [vmem:[#allocation7 + $0x488] sm:$0xff]
        %v790 = vld [vmem:[#allocation7 + $0x490] sm:$0xff]
        %v791 = vld [vmem:[#allocation7 + $0x498] sm:$0xff]
        %v792 = vld [vmem:[#allocation7 + $0x4a0] sm:$0xff]
        %v793 = vld [vmem:[#allocation7 + $0x4a8] sm:$0xff]
        %v794 = vld [vmem:[#allocation7 + $0x4b0] sm:$0xff]
        %v795 = vld [vmem:[#allocation7 + $0x4b8] sm:$0xff]
        %v796 = vld [vmem:[#allocation7 + $0x4c0] sm:$0xff]
        %v797 = vld [vmem:[#allocation7 + $0x4c8] sm:$0xff]
        %v798 = vld [vmem:[#allocation7 + $0x4d0] sm:$0xff]
        %v799 = vld [vmem:[#allocation7 + $0x4d8] sm:$0xff]
        %v800 = vld [vmem:[#allocation7 + $0x4e0] sm:$0xff]
        %v801 = vld [vmem:[#allocation7 + $0x4e8] sm:$0xff]
        %v802 = vld [vmem:[#allocation7 + $0x4f0] sm:$0xff]
        %v803 = vld [vmem:[#allocation7 + $0x4f8] sm:$0xff]
        %v804 = vld [vmem:[#allocation7 + $0x500] sm:$0xff]
        %v805 = vld [vmem:[#allocation7 + $0x508] sm:$0xff]
        %v806 = vld [vmem:[#allocation7 + $0x510] sm:$0xff]
        %v807 = vld [vmem:[#allocation7 + $0x518] sm:$0xff]
        %v808 = vld [vmem:[#allocation7 + $0x520] sm:$0xff]
        %v809 = vld [vmem:[#allocation7 + $0x528] sm:$0xff]
        %v810 = vld [vmem:[#allocation7 + $0x530] sm:$0xff]
        %v811 = vld [vmem:[#allocation7 + $0x538] sm:$0xff]
        %v812 = vld [vmem:[#allocation7 + $0x540] sm:$0xff]
        %v813 = vld [vmem:[#allocation7 + $0x548] sm:$0xff]
        %v814 = vld [vmem:[#allocation7 + $0x550] sm:$0xff]
        %v815 = vld [vmem:[#allocation7 + $0x558] sm:$0xff]
        %v816 = vld [vmem:[#allocation7 + $0x560] sm:$0xff]
        %v817 = vld [vmem:[#allocation7 + $0x568] sm:$0xff]
        %v818 = vld [vmem:[#allocation7 + $0x570] sm:$0xff]
        %v819 = vld [vmem:[#allocation7 + $0x578] sm:$0xff]
        %v820 = vlaneseq
        %v821 = vshrl.u32 %v820, 7
        %v822 = vsub.s32 5, %v821
        %v823 = vrot.slane %v316, %v822
        %v824 = vlaneseq
        %v825 = vshrl.u32 %v824, 7
        %v826 = vsub.s32 5, %v825
        %v827 = vrot.slane %v317, %v826
        %828 = vmatprep.subr.mxu0 %v789
        %829 = vmatpush1.msra.mxu0 %v788
        %830 = vmatprep.subr.mxu0 %v791
        %831 = vmatpush1.msra.mxu0 %v790
        %832 = vmatprep.subr.mxu0 %v793
        %833 = vmatpush1.msra.mxu0 %v792
        %834 = vmatprep.subr.mxu0 %v795
        %835 = vmatpush1.msra.mxu0 %v794
        %836 = vmatprep.subr.mxu0 %v797
        %837 = vmatpush1.msra.mxu0 %v796
        %838 = vmatprep.subr.mxu0 %v799
        %839 = vmatpush1.msra.mxu0 %v798
        %840 = vmatprep.subr.mxu0 %v801
        %841 = vmatpush1.msra.mxu0 %v800
        %842 = vmatprep.subr.mxu0 %v803
        %843 = vmatpush1.msra.mxu0 %v802
        %844 = vmatprep.subr.mxu0 %v805
        %845 = vmatpush1.msra.mxu0 %v804
        %846 = vmatprep.subr.mxu0 %v807
        %847 = vmatpush1.msra.mxu0 %v806
        %848 = vmatprep.subr.mxu0 %v809
        %849 = vmatpush1.msra.mxu0 %v808
        %850 = vmatprep.subr.mxu0 %v811
        %851 = vmatpush1.msra.mxu0 %v810
        %852 = vmatprep.subr.mxu0 %v813
        %853 = vmatpush1.msra.mxu0 %v812
        %854 = vmatprep.subr.mxu0 %v815
        %855 = vmatpush1.msra.mxu0 %v814
        %856 = vmatprep.subr.mxu0 %v817
        %857 = vmatpush1.msra.mxu0 %v816
        %858 = vmatprep.subr.mxu0 %v819
        %859 = vmatpush1.msra.mxu0 %v818
        %860 = vmatprep.subr.mxu0 0.0
        %861 = vmatpush1.msra.mxu0 0.0
        %862 = vmatprep.subr.mxu0 0.0
        %863 = vmatpush1.msra.mxu0 0.0
        %864 = vmatprep.subr.mxu0 0.0
        %865 = vmatpush1.msra.mxu0 0.0
        %866 = vmatprep.subr.mxu0 0.0
        %867 = vmatpush1.msra.mxu0 0.0
        %868 = vmatprep.subr.mxu0 0.0
        %869 = vmatpush1.msra.mxu0 0.0
        %870 = vmatprep.subr.mxu0 0.0
        %871 = vmatpush1.msra.mxu0 0.0
        %872 = vmatprep.subr.mxu0 0.0
        %873 = vmatpush1.msra.mxu0 0.0
        %874 = vmatprep.subr.mxu0 0.0
        %875 = vmatpush1.msra.mxu0 0.0
        %876 = vmatprep.subr.mxu0 0.0
        %877 = vmatpush1.msra.mxu0 0.0
        %878 = vmatprep.subr.mxu0 0.0
        %879 = vmatpush1.msra.mxu0 0.0
        %880 = vmatprep.subr.mxu0 0.0
        %881 = vmatpush1.msra.mxu0 0.0
        %882 = vmatprep.subr.mxu0 0.0
        %883 = vmatpush1.msra.mxu0 0.0
        %884 = vmatprep.subr.mxu0 0.0
        %885 = vmatpush1.msra.mxu0 0.0
        %886 = vmatprep.subr.mxu0 0.0
        %887 = vmatpush1.msra.mxu0 0.0
        %888 = vmatprep.subr.mxu0 0.0
        %889 = vmatpush1.msra.mxu0 0.0
        %890 = vmatprep.subr.mxu0 0.0
        %891 = vmatpush1.msra.mxu0 0.0
        %892 = vmatprep.mubr.f32.mxu0 0.0
        %893 = vmatmul.mubr.f32.gmra.mrb[0].mxu0 %v787
        %v894 = vpop.f32.mrb[0].mxu0
        %v895 = vadd.f32 %v823, %v894
        %v896 = vpop.f32.mrb[0].mxu0
        %v897 = vadd.f32 %v827, %v896
        %898 = vdwg.mxu0
        %899 = vst [vmem:[%s308] sm:$0xff] %v895
        %900 = vst [vmem:[%s308 + $0x8] sm:$0xff] %v897
        %901 = vst [vmem:[%s315] sm:$0xff] %v605
        %902 = vst [vmem:[%s315 + $0x8] sm:$0xff] %v607
        %s903 = sand.u32 %s132, 1
        %s904 = scalar_lea.sflag [#allocation4], %s903
        %s905 = sand.u32 %s132, 1
        %s906 = smul.addr %s905, 16
        %s907 = scalar_lea.vmem [#allocation10], %s906
        %s908 = sand.u32 %s158, 1
        %s909 = scalar_lea.sflag [#allocation12], %s908
        %s910 = sand.u32 %s158, 1
        %s911 = smul.addr %s910, 16
        %s912 = scalar_lea.vmem [#allocation11], %s911
        // Predicated region
        $region53: #{tpu_custom_call.1} parent=35 // pred_check
          %p913 = pneg %p142
        $region54: #{tpu_custom_call.1} parent=35 // pred_check_branch
          %915 = sbr.rel (%p913) target = $region56
        $region55: #{tpu_custom_call.1} parent=35 // pred_region
          %s917 = ssub.s32 256, 256
          %918 = vsyncadd %s904, %s917
          %s919 = smul.addr %s30, 2
          %s920 = smul.addr %s919, 128
          %s921 = scalar_lea.hbm %s4, %s920
          %s923 = sshll.u32 %s907, 4
          %s924 = int_to_ptr.vmem [resolvable:$true] %s923
          %926 = dma.vmem_to_hbm [thread:$0]  %s924, 256, %s921, %s904
        $region56: #{tpu_custom_call.1} parent=35 // pred_fallthru
          _
        // Predicated region
        $region57: #{tpu_custom_call.1} parent=35 // pred_check
          %p927 = pneg %p168
        $region58: #{tpu_custom_call.1} parent=35 // pred_check_branch
          %929 = sbr.rel (%p927) target = $region60
        $region59: #{tpu_custom_call.1} parent=35 // pred_region
          %s931 = ssub.s32 256, 256
          %932 = vsyncadd %s909, %s931
          %s933 = smul.addr %s30, 2
          %s934 = smul.addr %s933, 128
          %s935 = scalar_lea.hbm %s5, %s934
          %s937 = sshll.u32 %s912, 4
          %s938 = int_to_ptr.vmem [resolvable:$true] %s937
          %940 = dma.vmem_to_hbm [thread:$0]  %s938, 256, %s935, %s909
        $region60: #{tpu_custom_call.1} parent=35 // pred_fallthru
          _
      $region36: #{tpu_custom_call.1} parent=5 // pred_fallthru
        _
      %p941 = scmp.le.s32.totalorder 2, %s25
      // Predicated region
      $region61: #{tpu_custom_call.1} parent=5 // pred_check
        %p942 = pneg %p941
      $region62: #{tpu_custom_call.1} parent=5 // pred_check_branch
        %944 = sbr.rel (%p942) target = $region64
      $region63: #{tpu_custom_call.1} parent=5 // pred_region
        %s945 = ssub.s32 %s25, 2
        // Predicated region
        $region65: #{tpu_custom_call.1} parent=63 // pred_check
          %p946 = pneg %p148
        $region66: #{tpu_custom_call.1} parent=63 // pred_check_branch
          %948 = sbr.rel (%p946) target = $region68
        $region67: #{tpu_custom_call.1} parent=63 // pred_region
          %s949 = sand.u32 %s133, 1
          %s950 = scalar_lea.sflag [#allocation4], %s949
          %s951 = sand.u32 %s133, 1
          %s952 = smul.addr %s951, 16
          %s953 = scalar_lea.vmem [#allocation10], %s952
          %954 = dma.done %s950, 256
        $region68: #{tpu_custom_call.1} parent=63 // pred_fallthru
          _
        // Predicated region
        $region69: #{tpu_custom_call.1} parent=63 // pred_check
          %p955 = pneg %p174
        $region70: #{tpu_custom_call.1} parent=63 // pred_check_branch
          %957 = sbr.rel (%p955) target = $region72
        $region71: #{tpu_custom_call.1} parent=63 // pred_region
          %s958 = sand.u32 %s159, 1
          %s959 = scalar_lea.sflag [#allocation12], %s958
          %s960 = sand.u32 %s159, 1
          %s961 = smul.addr %s960, 16
          %s962 = scalar_lea.vmem [#allocation11], %s961
          %963 = dma.done %s959, 256
        $region72: #{tpu_custom_call.1} parent=63 // pred_fallthru
          _
      $region64: #{tpu_custom_call.1} parent=5 // pred_fallthru
        _
    $region6: #{tpu_custom_call.1} parent=1 // loop_footer
      %s29 = sadd.s32 1, %s25
    $region7: #{tpu_custom_call.1} parent=1 // loop_footer_branch
      %24 = sbr.rel target = $region3
    $region8: #{tpu_custom_call.1} parent=1 // loop_exit
      _
    %964 = vsyncpa [#allocation3], 1
    %s965 = scalar_lea.sflag [#allocation3], 1
    %966 = vsyncpa %s965, 1
    %967 = vsyncpa [#allocation6], 1
    %s968 = scalar_lea.sflag [#allocation6], 1
    %969 = vsyncpa %s968, 1
    %970 = vsyncpa [#allocation9], 1
    %971 = vsyncpa [#allocation4], 1
    %s972 = scalar_lea.sflag [#allocation4], 1
    %973 = vsyncpa %s972, 1
    %974 = vsyncpa [#allocation12], 1
    %s975 = scalar_lea.sflag [#allocation12], 1
    %976 = vsyncpa %s975, 1

</llo_original>
